<compile_context>
chip_gen: v7x
topology: tpu7x:2x2x1
jax: 0.10.0
libtpu: 0.0.40
codegen_flags: <defaults>
</compile_context>

<pallas_src>
import functools

import numpy as np

import jax
import jax.numpy as jnp
from jax.experimental import pallas as pl
from jax.experimental.pallas import tpu as pltpu


def _dequant_kernel(x_ref, w_ref, o_ref, *, offset, nb, tn_bits, mask_cols):
    # x_ref: (TM, TN*B) float32 bits; w_ref: (TN*B, TN) bf16 pre-scaled powers.
    x = x_ref[...]
    if mask_cols:
        # Ragged feature edge: zero the stale (out-of-bounds) bit columns of
        # the boundary block so garbage can't leak into valid output columns.
        j = pl.program_id(1)
        col = jax.lax.broadcasted_iota(jnp.int32, x.shape, 1) + j * tn_bits
        x = jnp.where(col < nb, x, 0.0)
    # bf16 is exact for 0/1 bits; cast is free under the DMA (mem-bound kernel).
    num = jnp.dot(x.astype(jnp.bfloat16), w_ref[...],
                  preferred_element_type=jnp.float32)
    o_ref[...] = num + offset


def dequantization_layer(x, B, *, tile_m=1024, tile_n=128):
    """Forward pass of DequantizationLayer. x: (batch, N*B) 0/1 bits."""
    x = jnp.asarray(x, dtype=jnp.float32)
    batch, nb = x.shape
    assert nb % B == 0, "feature dim must be divisible by B"
    n = nb // B

    # Lane-dense output tile; fall back to the full extent for small problems.
    tn = n if n <= tile_n else tile_n
    tm = batch if batch <= tile_m else tile_m
    grid = (pl.cdiv(batch, tm), pl.cdiv(n, tn))
    mask_cols = (n % tn) != 0

    # One shared diagonal block of the kron weight, built at trace time with
    # numpy: W[g*B + i, g] = 2**(B-1-i) / 2**B.  Powers of two -> exact bf16.
    powers = (2.0 ** np.arange(B - 1, -1, -1, dtype=np.float64)) / float(2 ** B)
    w_np = np.kron(np.eye(tn, dtype=np.float32),
                   powers.astype(np.float32).reshape(B, 1))      # (tn*B, tn)
    w = jnp.asarray(w_np).astype(jnp.bfloat16)

    offset = 0.5 / float(2 ** B)

    out = pl.pallas_call(
        functools.partial(_dequant_kernel, offset=offset, nb=nb,
                          tn_bits=tn * B, mask_cols=mask_cols),
        out_shape=jax.ShapeDtypeStruct((batch, n), jnp.float32),
        grid=grid,
        in_specs=[
            # x tile (i, j): rows [i*tm, ...), bit columns for the output
            # group window [j*tn, (j+1)*tn).
            pl.BlockSpec((tm, tn * B), lambda i, j: (i, j)),
            # Shared weight block: same tile for every grid point (resident).
            pl.BlockSpec((tn * B, tn), lambda i, j: (0, 0)),
        ],
        out_specs=pl.BlockSpec((tm, tn), lambda i, j: (i, j)),
        compiler_params=pltpu.CompilerParams(
            dimension_semantics=("parallel", "parallel"),
            # Lifts v5e's 16 MiB scoped default for larger B; still well under
            # v7x's 64 MiB physical VMEM.
            vmem_limit_bytes=48 * 1024 * 1024,
        ),
        cost_estimate=pl.CostEstimate(
            flops=2 * grid[0] * tm * grid[1] * (tn * B) * tn,
            transcendentals=0,
            bytes_accessed=batch * nb * 4 + batch * n * 4 + tn * B * tn * 2,
        ),
    )(x, w)
    return out


def _reference(x, B):
    # Pure-JAX reference mirroring Bit2Num + Dequantization.forward.
    batch, nb = x.shape
    n = nb // B
    bits = x.astype(jnp.float32).reshape(batch, n, B)
    weights = 2.0 ** jnp.arange(B - 1, -1, -1, dtype=jnp.float32)
    num = jnp.sum(bits * weights, axis=-1)
    return (num + 0.5) / (2 ** B)


# TODO(synk): only the forward pass is implemented; the module's custom
# autograd backward (gradient replication over bits) is out of scope here.

if __name__ == "__main__":
    key = jax.random.PRNGKey(0)
    B = 4  # bits per quantized value

    # Case 1: small single-tile problem implied by the module.
    batch, n = 8, 32
    bits = jax.random.bernoulli(key, p=0.5,
                                shape=(batch, n * B)).astype(jnp.float32)
    out = jax.block_until_ready(dequantization_layer(bits, B))
    ref = _reference(bits, B)
    assert out.shape == (batch, n)
    assert jnp.allclose(out, ref, atol=1e-6), "case 1 mismatch vs reference"

    # Case 2: ragged batch and feature edges (exercises boundary blocks and
    # the in-kernel K-column mask) with small tiles forcing a 2x2 grid.
    batch2, n2 = 10, 200
    bits2 = jax.random.bernoulli(jax.random.PRNGKey(0), p=0.5,
                                 shape=(batch2, n2 * B)).astype(jnp.float32)
    out2 = jax.block_until_ready(
        dequantization_layer(bits2, B, tile_m=8, tile_n=128))
    ref2 = _reference(bits2, B)
    assert out2.shape == (batch2, n2)
    assert jnp.allclose(out2, ref2, atol=1e-6), "case 2 mismatch vs reference"

    print("KERNEL_OK")
</pallas_src>

<mosaic_0001>
module attributes {stable_mosaic.version = 11 : i64} {
  func.func @_dequant_kernel(%arg0: i32, %arg1: i32, %arg2: memref<8x128xf32, #tpu.memory_space<vmem>>, %arg3: memref<128x32xbf16, #tpu.memory_space<vmem>>, %arg4: memref<8x32xf32, #tpu.memory_space<vmem>>) attributes {dimension_semantics = [#tpu.dimension_semantics<parallel>, #tpu.dimension_semantics<parallel>], iteration_bounds = array<i64: 1, 1>, scalar_prefetch = 0 : i64, scratch_operands = 0 : i64, tpu.core_type = #tpu.core_type<tc>, window_params = [{transform_indices = @transform_0, window_bounds = array<i64: 8, 128>}, {pipeline_mode = #tpu.pipeline_mode<synchronous>, transform_indices = @transform_1, window_bounds = array<i64: 128, 32>}, {transform_indices = @transform_2, window_bounds = array<i64: 8, 32>}]} {
    %c0 = arith.constant 0 : index
    %c0_0 = arith.constant 0 : index
    %0 = vector.load %arg2[%c0, %c0_0] : memref<8x128xf32, #tpu.memory_space<vmem>>, vector<8x128xf32>
    %1 = arith.truncf %0 : vector<8x128xf32> to vector<8x128xbf16>
    %c0_1 = arith.constant 0 : index
    %c0_2 = arith.constant 0 : index
    %2 = vector.load %arg3[%c0_1, %c0_2] : memref<128x32xbf16, #tpu.memory_space<vmem>>, vector<128x32xbf16>
    %cst = arith.constant dense<0.000000e+00> : vector<8x32xf32>
    %3 = tpu.matmul %1, %2, %cst {dimension_numbers = #tpu.dot_dimension_numbers<[1], [0], [0], [1], [0, 0, 1, 1], [], []>} : vector<8x128xbf16>, vector<128x32xbf16>, vector<8x32xf32> -> vector<8x32xf32>
    %cst_3 = arith.constant 3.125000e-02 : f32
    %4 = vector.broadcast %cst_3 : f32 to vector<8x32xf32>
    %5 = arith.addf %3, %4 : vector<8x32xf32>
    %c0_4 = arith.constant 0 : index
    %c0_5 = arith.constant 0 : index
    %6 = vector.load %arg4[%c0_4, %c0_5] : memref<8x32xf32, #tpu.memory_space<vmem>>, vector<8x32xf32>
    tpu.vector_store %arg4[%c0_4, %c0_5], %5 {strides = array<i32>} : memref<8x32xf32, #tpu.memory_space<vmem>>, vector<8x32xf32>,
    return
  }
  func.func @transform_0(%arg0: i32, %arg1: i32) -> (i32, i32) {
    %c0_i32 = arith.constant 0 : i32
    return %arg0, %arg1 : i32, i32
  }
  func.func @transform_1(%arg0: i32, %arg1: i32) -> (i32, i32) {
    %c0_i32 = arith.constant 0 : i32
    %c0_i32_0 = arith.constant 0 : i32
    %c0_i32_1 = arith.constant 0 : i32
    return %c0_i32, %c0_i32_0 : i32, i32
  }
  func.func @transform_2(%arg0: i32, %arg1: i32) -> (i32, i32) {
    %c0_i32 = arith.constant 0 : i32
    return %arg0, %arg1 : i32, i32
  }
}

</mosaic_0001>

<llo_original>
// kernel: tpu_custom_call.1
$region0: #{tpu_custom_call.1}
  #allocation0 [shape = 'u32[]', space=smem, size = 0x4, offset = 0x4, fixed_abs, tag = 'smem constant byte address 0x4 - core index']
  #allocation1 [shape = 'u32[144,128]{1,0:T(1,128)}', space=vmem, size = 0x12000, scoped, tag = 'internal scratch']
  %s0 = inlined_call_operand.vmem [shape: f32[8,128], index: 0, kind: input, shape index: {}]
  %s1 = inlined_call_operand.vmem [shape: bf16[128,32], index: 1, kind: input, shape index: {}]
  %s2 = inlined_call_operand.hbm [shape: f32[8,32], index: 2, kind: output, shape index: {}]
  %s3 = sld [smem:[#allocation0]]
  $region18: #{tpu_custom_call.1} parent=0
    _
  %s5 = ssub.s32 1, %s3
  %s6 = scalar_select 0, %s5, %s3
  $region1: #{tpu_custom_call.1} parent=0
    #allocation2 [shape = 'u8[4096]{0}', space=vmem, size = 0x1000, scoped, tag = 'output window, operand 0, single buffered']
    #allocation3 [shape = 's32[1]{0}', space=sflag, size = 0x4, scoped, tag = 'scoped memory for tpu_custom_call.1']
    %7 = vsyncpa [#allocation3], 0
    // Predicated region
    $region2: #{tpu_custom_call.1} parent=1 // pred_check
      _
    $region3: #{tpu_custom_call.1} parent=1 // pred_check_branch
      %9 = sbr.rel (0) target = $region5
    $region4: #{tpu_custom_call.1} parent=1 // pred_region
      _
    $region5: #{tpu_custom_call.1} parent=1 // pred_fallthru
      _
    // Predicated region
    $region6: #{tpu_custom_call.1} parent=1 // pred_check
      _
    $region7: #{tpu_custom_call.1} parent=1 // pred_check_branch
      %11 = sbr.rel (0) target = $region9
    $region8: #{tpu_custom_call.1} parent=1 // pred_region
      _
    $region9: #{tpu_custom_call.1} parent=1 // pred_fallthru
      _
    %v13 = vld [vmem:[%s0] sm:$0xff]
    %v14 = vpack.c.bf16 %v13, %v13
    %v15 = vld [vmem:[%s1] sm:$0xf]
    %v16 = vld [vmem:[%s1 + $0x4] sm:$0xf]
    %v17 = vld [vmem:[%s1 + $0x8] sm:$0xf]
    %v18 = vld [vmem:[%s1 + $0xc] sm:$0xf]
    %v19 = vld [vmem:[%s1 + $0x10] sm:$0xf]
    %v20 = vld [vmem:[%s1 + $0x14] sm:$0xf]
    %v21 = vld [vmem:[%s1 + $0x18] sm:$0xf]
    %v22 = vld [vmem:[%s1 + $0x1c] sm:$0xf]
    %v23 = vld [vmem:[%s1 + $0x20] sm:$0xf]
    %v24 = vld [vmem:[%s1 + $0x24] sm:$0xf]
    %v25 = vld [vmem:[%s1 + $0x28] sm:$0xf]
    %v26 = vld [vmem:[%s1 + $0x2c] sm:$0xf]
    %v27 = vld [vmem:[%s1 + $0x30] sm:$0xf]
    %v28 = vld [vmem:[%s1 + $0x34] sm:$0xf]
    %v29 = vld [vmem:[%s1 + $0x38] sm:$0xf]
    %v30 = vld [vmem:[%s1 + $0x3c] sm:$0xf]
    %v47 = vunpack.c.l.b16 %v15
    %v48 = vunpack.c.l.b16 %v16
    %v49 = vunpack.c.l.b16 %v17
    %v50 = vunpack.c.l.b16 %v18
    %v51 = vunpack.c.l.b16 %v19
    %v52 = vunpack.c.l.b16 %v20
    %v53 = vunpack.c.l.b16 %v21
    %v54 = vunpack.c.l.b16 %v22
    %v55 = vunpack.c.l.b16 %v23
    %v56 = vunpack.c.l.b16 %v24
    %v57 = vunpack.c.l.b16 %v25
    %v58 = vunpack.c.l.b16 %v26
    %v59 = vunpack.c.l.b16 %v27
    %v60 = vunpack.c.l.b16 %v28
    %v61 = vunpack.c.l.b16 %v29
    %v62 = vunpack.c.l.b16 %v30
    %v63 = vpack.c.b16 %v48, %v47
    %v64 = vpack.c.b16 %v50, %v49
    %v65 = vpack.c.b16 %v52, %v51
    %v66 = vpack.c.b16 %v54, %v53
    %v67 = vpack.c.b16 %v56, %v55
    %v68 = vpack.c.b16 %v58, %v57
    %v69 = vpack.c.b16 %v60, %v59
    %v70 = vpack.c.b16 %v62, %v61
    %79 = vmatprep.subr.bf16.mxu0 0
    %80 = vmatpush1.bf16.msra.mxu0 %v63
    %81 = vmatprep.subr.bf16.mxu0 0
    %82 = vmatpush1.bf16.msra.mxu0 %v64
    %83 = vmatprep.subr.bf16.mxu0 0
    %84 = vmatpush1.bf16.msra.mxu0 %v65
    %85 = vmatprep.subr.bf16.mxu0 0
    %86 = vmatpush1.bf16.msra.mxu0 %v66
    %87 = vmatprep.subr.bf16.mxu0 0
    %88 = vmatpush1.bf16.msra.mxu0 %v67
    %89 = vmatprep.subr.bf16.mxu0 0
    %90 = vmatpush1.bf16.msra.mxu0 %v68
    %91 = vmatprep.subr.bf16.mxu0 0
    %92 = vmatpush1.bf16.msra.mxu0 %v69
    %93 = vmatprep.subr.bf16.mxu0 0
    %94 = vmatpush1.bf16.msra.mxu0 %v70
    %95 = vmatprep.subr.bf16.mxu0 0
    %96 = vmatpush1.bf16.msra.mxu0 0
    %97 = vmatprep.subr.bf16.mxu0 0
    %98 = vmatpush1.bf16.msra.mxu0 0
    %99 = vmatprep.subr.bf16.mxu0 0
    %100 = vmatpush1.bf16.msra.mxu0 0
    %101 = vmatprep.subr.bf16.mxu0 0
    %102 = vmatpush1.bf16.msra.mxu0 0
    %103 = vmatprep.subr.bf16.mxu0 0
    %104 = vmatpush1.bf16.msra.mxu0 0
    %105 = vmatprep.subr.bf16.mxu0 0
    %106 = vmatpush1.bf16.msra.mxu0 0
    %107 = vmatprep.subr.bf16.mxu0 0
    %108 = vmatpush1.bf16.msra.mxu0 0
    %109 = vmatprep.subr.bf16.mxu0 0
    %110 = vmatpush1.bf16.msra.mxu0 0
    %111 = vmatprep.mubr.bf16.mxu0 0
    %112 = vmatmul.mubr.bf16.gmra.mrb[0].mxu0 %v14
    %v113 = vpop.f32.mrb[0].mxu0
    %v114 = vadd.f32 0.03125, %v113
    %v115 = vpop.f32.mrb[0].mxu0
    %v116 = vpop.f32.mrb[0].mxu0
    %v117 = vpop.f32.mrb[0].mxu0
    %118 = vdwg.mxu0
    %vm119 = vcmask 261120
    %120 = vst.msk [vmem:[#allocation2] sm:$0xff] %vm119, %v114
    // Predicated region
    $region10: #{tpu_custom_call.1} parent=1 // pred_check
      _
    $region11: #{tpu_custom_call.1} parent=1 // pred_check_branch
      %122 = sbr.rel (0) target = $region13
    $region12: #{tpu_custom_call.1} parent=1 // pred_region
      %s124 = ssub.s32 128, 128
      %125 = vsyncadd [#allocation3], %s124
      %s127 = sshll.u32 [#allocation2], 4
      %s128 = int_to_ptr.vmem [resolvable:$true] %s127
      %130 = dma.vmem_to_hbm [thread:$0]  %s128, 128, %s2, [#allocation3]
    $region13: #{tpu_custom_call.1} parent=1 // pred_fallthru
      _
    // Predicated region
    $region14: #{tpu_custom_call.1} parent=1 // pred_check
      _
    $region15: #{tpu_custom_call.1} parent=1 // pred_check_branch
      %132 = sbr.rel (0) target = $region17
    $region16: #{tpu_custom_call.1} parent=1 // pred_region
      %133 = dma.done [#allocation3], 128
    $region17: #{tpu_custom_call.1} parent=1 // pred_fallthru
      _
    %134 = vsyncpa [#allocation3], 1

</llo_original>
